<compile_context>
chip_gen: v6e
topology: v6e:2x2x1
jax: 0.10.0
libtpu: 0.0.40
codegen_flags: <defaults>
</compile_context>

<pallas_src>
import numpy as np
import jax
import jax.numpy as jnp
from jax.experimental import pallas as pl
from jax.experimental.pallas import tpu as pltpu


# ---------------------------------------------------------------------------
# Static (host-side) helpers
# ---------------------------------------------------------------------------
def _build_tap_masks(H, W):
    """(9, H*W) 0/1 float32 validity masks for the 3x3 taps ('SAME' padding)."""
    yy, xx = np.meshgrid(np.arange(H), np.arange(W), indexing="ij")
    rows = []
    for ky in range(3):
        for kx in range(3):
            oy, ox = ky - 1, kx - 1
            valid = ((yy + oy >= 0) & (yy + oy < H) &
                     (xx + ox >= 0) & (xx + ox < W))
            rows.append(valid.reshape(-1))
    return np.stack(rows).astype(np.float32)


def _gather_runs(lm, fm, layer_ch):
    """Static concat-channel indices -> coalesced (layer, lo, hi) row slices."""
    offsets = np.cumsum([0] + [layer_ch[l] for l in lm])
    runs = []
    for g in fm:
        assert 0 <= g < offsets[-1], "filter-mask index out of range"
        seg = int(np.searchsorted(offsets, g, side="right")) - 1
        layer, ch = lm[seg], int(g - offsets[seg])
        if runs and runs[-1][0] == layer and runs[-1][2] == ch:
            runs[-1] = (layer, runs[-1][1], ch + 1)      # extend contiguous run
        else:
            runs.append((layer, ch, ch + 1))
    return runs


# ---------------------------------------------------------------------------
# Fused kernel: conv0+ReLU -> conv1+ReLU -> static per-pair channel gather
# ---------------------------------------------------------------------------
def _make_fused_kernel(lmask, fmask_lists, layer_ch, cin_pad, c1, H, W, N):
    HW = H * W
    L = N * HW
    n_pairs = len(lmask)
    gather_runs = [_gather_runs(lm, fm, layer_ch)
                   for lm, fm in zip(lmask, fmask_lists)]

    def conv3x3_relu(xf, cpad, mask, w_t, b, patches_ref):
        # xf: (cpad, L) lane-dense; w_t: (Cout, 9*cpad); b: (Cout, 1);
        # mask: (9*cpad, L) pre-broadcast tap-validity mask.
        t = 0
        for ky in range(3):
            for kx in range(3):
                d = (ky - 1) * W + (kx - 1)        # flat lane shift of this tap
                s = (-d) % L
                shifted = xf if s == 0 else pltpu.roll(xf, s, axis=1)
                # Aligned 8-row store into the scratch patch matrix.
                patches_ref[t * cpad:(t + 1) * cpad, :] = shifted
                t += 1
        # Single full-width multiply zeroes every tap that crossed an image
        # boundary ('SAME' padding), then one MXU matmul.
        patches = patches_ref[0:9 * cpad, :] * mask
        y = jnp.dot(w_t, patches, preferred_element_type=jnp.float32)
        return jnp.maximum(y + b, 0.0)             # (Cout, L)

    def kernel(x_ref, w0_ref, b0_ref, w1_ref, b1_ref, m0_ref, m1_ref, *rest):
        out_refs = rest[:n_pairs]
        patches_ref = rest[n_pairs]                # shared VMEM scratch
        f0 = conv3x3_relu(x_ref[...].astype(jnp.float32), cin_pad, m0_ref[...],
                          w0_ref[...], b0_ref[...], patches_ref)
        f1 = conv3x3_relu(f0, c1, m1_ref[...],
                          w1_ref[...], b1_ref[...], patches_ref)
        fmaps = (f0, f1)
        # index_select with static masks: static row slices, no matmul.
        for p, runs in enumerate(gather_runs):
            pieces = [fmaps[layer][lo:hi, :] for (layer, lo, hi) in runs]
            sel = pieces[0] if len(pieces) == 1 else jnp.concatenate(pieces, axis=0)
            out_refs[p][...] = sel.astype(out_refs[p].dtype)

    return kernel


# ---------------------------------------------------------------------------
# Module forward: fmaps(x) -> [f0, f1]; for each (lm, fm): cat(dim=1) + gather.
# ---------------------------------------------------------------------------
def filter_fmaps_forward(x_nchw, params, lmask, fmask):
    N, Cin, H, W = x_nchw.shape
    HW = H * W
    L = N * HW
    C1 = params["w0"].shape[-1]
    C2 = params["w1"].shape[-1]
    dtype = x_nchw.dtype
    layer_ch = [C1, C2]

    # The roll+mask im2col trick is exact only for 3x3 / stride-1 / SAME.
    assert params["w0"].shape[:2] == (3, 3) and params["w1"].shape[:2] == (3, 3)
    assert C1 % 8 == 0 and C2 % 8 == 0, "conv output channels must be 8-aligned"

    cin_pad = max(8, -(-Cin // 8) * 8)             # pad Cin to sublane multiple

    # x: (N, Cin, H, W) -> (cin_pad, N*HW): batch folded into the lane dim.
    x_flat = jnp.pad(jnp.transpose(x_nchw, (1, 0, 2, 3)).reshape(Cin, L),
                     ((0, cin_pad - Cin), (0, 0)))
    # Weights (3,3,I,O) -> (O, 9*I_pad), rows ordered (tap, in-channel).
    w0p = jnp.pad(params["w0"], ((0, 0), (0, 0), (0, cin_pad - Cin), (0, 0)))
    w0t = jnp.transpose(w0p, (3, 0, 1, 2)).reshape(C1, 9 * cin_pad)
    w1t = jnp.transpose(params["w1"], (3, 0, 1, 2)).reshape(C2, 9 * C1)
    b0 = params["b0"].reshape(C1, 1)
    b1 = params["b1"].reshape(C2, 1)

    # Tap-validity masks: tiled across batch, pre-broadcast per conv channel
    # count (built host-side so no broadcast_in_dim inside the kernel).
    tap = np.tile(_build_tap_masks(H, W), (1, N))            # (9, L)
    m0 = jnp.asarray(np.repeat(tap, cin_pad, axis=0))        # (9*cin_pad, L)
    m1 = jnp.asarray(np.repeat(tap, C1, axis=0))             # (9*C1, L)

    fmask_lists = [tuple(int(i) for i in np.asarray(fm)) for fm in fmask]
    kernel = _make_fused_kernel(lmask, fmask_lists, layer_ch,
                                cin_pad, C1, H, W, N)

    out_shape = tuple(jax.ShapeDtypeStruct((len(fm), L), dtype)
                      for fm in fmask_lists)

    flops = 2 * (9 * cin_pad * C1 + 9 * C1 * C2) * L
    bytes_accessed = 4 * (x_flat.size + w0t.size + w1t.size + b0.size + b1.size
                          + m0.size + m1.size
                          + sum(len(fm) * L for fm in fmask_lists))

    # TODO(synk): for large H*W on v7x (64 MiB VMEM) add an H-tiled grid axis
    # with a 2-row halo (or lane-tiled N*HW axis); at these shapes everything
    # (inputs + masks + scratch ~ <1 MiB) is fully resident.
    outs = pl.pallas_call(
        kernel,
        out_shape=out_shape,
        scratch_shapes=[pltpu.VMEM((9 * max(cin_pad, C1), L), jnp.float32)],
        compiler_params=pltpu.CompilerParams(vmem_limit_bytes=32 * 1024 * 1024),
        cost_estimate=pl.CostEstimate(flops=flops, transcendentals=0,
                                      bytes_accessed=bytes_accessed),
    )(x_flat, w0t, b0, w1t, b1, m0, m1)

    # (K, N*HW) -> (N, K, H, W): tiny wrapper relayout (a few KiB).
    return [jnp.transpose(o.reshape(o.shape[0], N, H, W), (1, 0, 2, 3))
            for o in outs]


# ---------------------------------------------------------------------------
# Pure-JAX reference for verification.
# ---------------------------------------------------------------------------
def filter_fmaps_reference(x_nchw, params, lmask, fmask):
    x = jnp.transpose(x_nchw, (0, 2, 3, 1))
    dn = ("NHWC", "HWIO", "NHWC")
    f0 = jax.nn.relu(jax.lax.conv_general_dilated(
        x, params["w0"], (1, 1), "SAME", dimension_numbers=dn) + params["b0"])
    f1 = jax.nn.relu(jax.lax.conv_general_dilated(
        f0, params["w1"], (1, 1), "SAME", dimension_numbers=dn) + params["b1"])
    fmaps = [jnp.transpose(f0, (0, 3, 1, 2)), jnp.transpose(f1, (0, 3, 1, 2))]
    return [jnp.take(jnp.concatenate([fmaps[l] for l in lm], axis=1),
                     jnp.asarray(fm), axis=1)
            for lm, fm in zip(lmask, fmask)]


if __name__ == "__main__":
    key = jax.random.PRNGKey(0)
    k_x, k_w0, k_b0, k_w1, k_b1 = jax.random.split(key, 5)

    N, Cin, H, W = 2, 4, 16, 16
    C1, C2 = 8, 8

    x = jax.random.normal(k_x, (N, Cin, H, W), jnp.float32)
    params = {
        "w0": 0.1 * jax.random.normal(k_w0, (3, 3, Cin, C1), jnp.float32),
        "b0": 0.1 * jax.random.normal(k_b0, (C1,), jnp.float32),
        "w1": 0.1 * jax.random.normal(k_w1, (3, 3, C1, C2), jnp.float32),
        "b1": 0.1 * jax.random.normal(k_b1, (C2,), jnp.float32),
    }

    # Layer masks and filter masks (static, non-trainable module config).
    lmask = [[0, 1], [1]]
    fmask = [np.array([0, 3, 9, 12, 15], dtype=np.int32),
             np.array([1, 2, 7], dtype=np.int32)]

    outs = filter_fmaps_forward(x, params, lmask, fmask)
    outs = [jax.block_until_ready(o) for o in outs]

    refs = filter_fmaps_reference(x, params, lmask, fmask)
    for o, r in zip(outs, refs):
        np.testing.assert_allclose(np.asarray(o), np.asarray(r),
                                   rtol=1e-5, atol=1e-5)

    print("KERNEL_OK")
</pallas_src>

<mosaic_0001>
module attributes {stable_mosaic.version = 11 : i64} {
  func.func @kernel(%arg0: memref<8x512xf32, #tpu.memory_space<vmem>>, %arg1: memref<8x72xf32, #tpu.memory_space<vmem>>, %arg2: memref<8x1xf32, #tpu.memory_space<vmem>>, %arg3: memref<8x72xf32, #tpu.memory_space<vmem>>, %arg4: memref<8x1xf32, #tpu.memory_space<vmem>>, %arg5: memref<72x512xf32, #tpu.memory_space<vmem>>, %arg6: memref<72x512xf32, #tpu.memory_space<vmem>>, %arg7: memref<5x512xf32, #tpu.memory_space<vmem>>, %arg8: memref<3x512xf32, #tpu.memory_space<vmem>>, %arg9: memref<72x512xf32, #tpu.memory_space<vmem>>) attributes {dimension_semantics = [], scalar_prefetch = 0 : i64, scratch_operands = 1 : i64, tpu.core_type = #tpu.core_type<tc>} {
    %c0 = arith.constant 0 : index
    %c0_0 = arith.constant 0 : index
    %0 = vector.load %arg0[%c0, %c0_0] : memref<8x512xf32, #tpu.memory_space<vmem>>, vector<8x512xf32>
    %c0_1 = arith.constant 0 : index
    %c0_2 = arith.constant 0 : index
    %1 = vector.load %arg5[%c0_1, %c0_2] : memref<72x512xf32, #tpu.memory_space<vmem>>, vector<72x512xf32>
    %c0_3 = arith.constant 0 : index
    %c0_4 = arith.constant 0 : index
    %2 = vector.load %arg1[%c0_3, %c0_4] : memref<8x72xf32, #tpu.memory_space<vmem>>, vector<8x72xf32>
    %c0_5 = arith.constant 0 : index
    %c0_6 = arith.constant 0 : index
    %3 = vector.load %arg2[%c0_5, %c0_6] : memref<8x1xf32, #tpu.memory_space<vmem>>, vector<8x1xf32>
    %c17_i32 = arith.constant 17 : i32
    %4 = tpu.dynamic_rotate %0 by %c17_i32 dim 1 : vector<8x512xf32>, i32 -> vector<8x512xf32>
    %c0_7 = arith.constant 0 : index
    %c0_8 = arith.constant 0 : index
    %5 = vector.load %arg9[%c0_7, %c0_8] : memref<72x512xf32, #tpu.memory_space<vmem>>, vector<8x512xf32>
    tpu.vector_store %arg9[%c0_7, %c0_8], %4 {strides = array<i32>} : memref<72x512xf32, #tpu.memory_space<vmem>>, vector<8x512xf32>,
    %c16_i32 = arith.constant 16 : i32
    %6 = tpu.dynamic_rotate %0 by %c16_i32 dim 1 : vector<8x512xf32>, i32 -> vector<8x512xf32>
    %c8 = arith.constant 8 : index
    %c0_9 = arith.constant 0 : index
    %7 = vector.load %arg9[%c8, %c0_9] : memref<72x512xf32, #tpu.memory_space<vmem>>, vector<8x512xf32>
    tpu.vector_store %arg9[%c8, %c0_9], %6 {strides = array<i32>} : memref<72x512xf32, #tpu.memory_space<vmem>>, vector<8x512xf32>,
    %c15_i32 = arith.constant 15 : i32
    %8 = tpu.dynamic_rotate %0 by %c15_i32 dim 1 : vector<8x512xf32>, i32 -> vector<8x512xf32>
    %c16 = arith.constant 16 : index
    %c0_10 = arith.constant 0 : index
    %9 = vector.load %arg9[%c16, %c0_10] : memref<72x512xf32, #tpu.memory_space<vmem>>, vector<8x512xf32>
    tpu.vector_store %arg9[%c16, %c0_10], %8 {strides = array<i32>} : memref<72x512xf32, #tpu.memory_space<vmem>>, vector<8x512xf32>,
    %c1_i32 = arith.constant 1 : i32
    %10 = tpu.dynamic_rotate %0 by %c1_i32 dim 1 : vector<8x512xf32>, i32 -> vector<8x512xf32>
    %c24 = arith.constant 24 : index
    %c0_11 = arith.constant 0 : index
    %11 = vector.load %arg9[%c24, %c0_11] : memref<72x512xf32, #tpu.memory_space<vmem>>, vector<8x512xf32>
    tpu.vector_store %arg9[%c24, %c0_11], %10 {strides = array<i32>} : memref<72x512xf32, #tpu.memory_space<vmem>>, vector<8x512xf32>,
    %c32 = arith.constant 32 : index
    %c0_12 = arith.constant 0 : index
    %12 = vector.load %arg9[%c32, %c0_12] : memref<72x512xf32, #tpu.memory_space<vmem>>, vector<8x512xf32>
    tpu.vector_store %arg9[%c32, %c0_12], %0 {strides = array<i32>} : memref<72x512xf32, #tpu.memory_space<vmem>>, vector<8x512xf32>,
    %c511_i32 = arith.constant 511 : i32
    %13 = tpu.dynamic_rotate %0 by %c511_i32 dim 1 : vector<8x512xf32>, i32 -> vector<8x512xf32>
    %c40 = arith.constant 40 : index
    %c0_13 = arith.constant 0 : index
    %14 = vector.load %arg9[%c40, %c0_13] : memref<72x512xf32, #tpu.memory_space<vmem>>, vector<8x512xf32>
    tpu.vector_store %arg9[%c40, %c0_13], %13 {strides = array<i32>} : memref<72x512xf32, #tpu.memory_space<vmem>>, vector<8x512xf32>,
    %c497_i32 = arith.constant 497 : i32
    %15 = tpu.dynamic_rotate %0 by %c497_i32 dim 1 : vector<8x512xf32>, i32 -> vector<8x512xf32>
    %c48 = arith.constant 48 : index
    %c0_14 = arith.constant 0 : index
    %16 = vector.load %arg9[%c48, %c0_14] : memref<72x512xf32, #tpu.memory_space<vmem>>, vector<8x512xf32>
    tpu.vector_store %arg9[%c48, %c0_14], %15 {strides = array<i32>} : memref<72x512xf32, #tpu.memory_space<vmem>>, vector<8x512xf32>,
    %c496_i32 = arith.constant 496 : i32
    %17 = tpu.dynamic_rotate %0 by %c496_i32 dim 1 : vector<8x512xf32>, i32 -> vector<8x512xf32>
    %c56 = arith.constant 56 : index
    %c0_15 = arith.constant 0 : index
    %18 = vector.load %arg9[%c56, %c0_15] : memref<72x512xf32, #tpu.memory_space<vmem>>, vector<8x512xf32>
    tpu.vector_store %arg9[%c56, %c0_15], %17 {strides = array<i32>} : memref<72x512xf32, #tpu.memory_space<vmem>>, vector<8x512xf32>,
    %c495_i32 = arith.constant 495 : i32
    %19 = tpu.dynamic_rotate %0 by %c495_i32 dim 1 : vector<8x512xf32>, i32 -> vector<8x512xf32>
    %c64 = arith.constant 64 : index
    %c0_16 = arith.constant 0 : index
    %20 = vector.load %arg9[%c64, %c0_16] : memref<72x512xf32, #tpu.memory_space<vmem>>, vector<8x512xf32>
    tpu.vector_store %arg9[%c64, %c0_16], %19 {strides = array<i32>} : memref<72x512xf32, #tpu.memory_space<vmem>>, vector<8x512xf32>,
    %c0_17 = arith.constant 0 : index
    %c0_18 = arith.constant 0 : index
    %21 = vector.load %arg9[%c0_17, %c0_18] : memref<72x512xf32, #tpu.memory_space<vmem>>, vector<72x512xf32>
    %22 = arith.mulf %21, %1 : vector<72x512xf32>
    %cst = arith.constant dense<0.000000e+00> : vector<8x512xf32>
    %23 = tpu.matmul %2, %22, %cst {dimension_numbers = #tpu.dot_dimension_numbers<[1], [0], [0], [1], [0, 0, 1, 1], [], []>} : vector<8x72xf32>, vector<72x512xf32>, vector<8x512xf32> -> vector<8x512xf32>
    %24 = vector.broadcast %3 : vector<8x1xf32> to vector<8x512xf32>
    %25 = arith.addf %23, %24 : vector<8x512xf32>
    %cst_19 = arith.constant 0.000000e+00 : f32
    %26 = vector.broadcast %cst_19 : f32 to vector<8x512xf32>
    %27 = arith.maximumf %25, %26 : vector<8x512xf32>
    %c0_20 = arith.constant 0 : index
    %c0_21 = arith.constant 0 : index
    %28 = vector.load %arg6[%c0_20, %c0_21] : memref<72x512xf32, #tpu.memory_space<vmem>>, vector<72x512xf32>
    %c0_22 = arith.constant 0 : index
    %c0_23 = arith.constant 0 : index
    %29 = vector.load %arg3[%c0_22, %c0_23] : memref<8x72xf32, #tpu.memory_space<vmem>>, vector<8x72xf32>
    %c0_24 = arith.constant 0 : index
    %c0_25 = arith.constant 0 : index
    %30 = vector.load %arg4[%c0_24, %c0_25] : memref<8x1xf32, #tpu.memory_space<vmem>>, vector<8x1xf32>
    %c17_i32_26 = arith.constant 17 : i32
    %31 = tpu.dynamic_rotate %27 by %c17_i32_26 dim 1 : vector<8x512xf32>, i32 -> vector<8x512xf32>
    %c0_27 = arith.constant 0 : index
    %c0_28 = arith.constant 0 : index
    %32 = vector.load %arg9[%c0_27, %c0_28] : memref<72x512xf32, #tpu.memory_space<vmem>>, vector<8x512xf32>
    tpu.vector_store %arg9[%c0_27, %c0_28], %31 {strides = array<i32>} : memref<72x512xf32, #tpu.memory_space<vmem>>, vector<8x512xf32>,
    %c16_i32_29 = arith.constant 16 : i32
    %33 = tpu.dynamic_rotate %27 by %c16_i32_29 dim 1 : vector<8x512xf32>, i32 -> vector<8x512xf32>
    %c8_30 = arith.constant 8 : index
    %c0_31 = arith.constant 0 : index
    %34 = vector.load %arg9[%c8_30, %c0_31] : memref<72x512xf32, #tpu.memory_space<vmem>>, vector<8x512xf32>
    tpu.vector_store %arg9[%c8_30, %c0_31], %33 {strides = array<i32>} : memref<72x512xf32, #tpu.memory_space<vmem>>, vector<8x512xf32>,
    %c15_i32_32 = arith.constant 15 : i32
    %35 = tpu.dynamic_rotate %27 by %c15_i32_32 dim 1 : vector<8x512xf32>, i32 -> vector<8x512xf32>
    %c16_33 = arith.constant 16 : index
    %c0_34 = arith.constant 0 : index
    %36 = vector.load %arg9[%c16_33, %c0_34] : memref<72x512xf32, #tpu.memory_space<vmem>>, vector<8x512xf32>
    tpu.vector_store %arg9[%c16_33, %c0_34], %35 {strides = array<i32>} : memref<72x512xf32, #tpu.memory_space<vmem>>, vector<8x512xf32>,
    %c1_i32_35 = arith.constant 1 : i32
    %37 = tpu.dynamic_rotate %27 by %c1_i32_35 dim 1 : vector<8x512xf32>, i32 -> vector<8x512xf32>
    %c24_36 = arith.constant 24 : index
    %c0_37 = arith.constant 0 : index
    %38 = vector.load %arg9[%c24_36, %c0_37] : memref<72x512xf32, #tpu.memory_space<vmem>>, vector<8x512xf32>
    tpu.vector_store %arg9[%c24_36, %c0_37], %37 {strides = array<i32>} : memref<72x512xf32, #tpu.memory_space<vmem>>, vector<8x512xf32>,
    %c32_38 = arith.constant 32 : index
    %c0_39 = arith.constant 0 : index
    %39 = vector.load %arg9[%c32_38, %c0_39] : memref<72x512xf32, #tpu.memory_space<vmem>>, vector<8x512xf32>
    tpu.vector_store %arg9[%c32_38, %c0_39], %27 {strides = array<i32>} : memref<72x512xf32, #tpu.memory_space<vmem>>, vector<8x512xf32>,
    %c511_i32_40 = arith.constant 511 : i32
    %40 = tpu.dynamic_rotate %27 by %c511_i32_40 dim 1 : vector<8x512xf32>, i32 -> vector<8x512xf32>
    %c40_41 = arith.constant 40 : index
    %c0_42 = arith.constant 0 : index
    %41 = vector.load %arg9[%c40_41, %c0_42] : memref<72x512xf32, #tpu.memory_space<vmem>>, vector<8x512xf32>
    tpu.vector_store %arg9[%c40_41, %c0_42], %40 {strides = array<i32>} : memref<72x512xf32, #tpu.memory_space<vmem>>, vector<8x512xf32>,
    %c497_i32_43 = arith.constant 497 : i32
    %42 = tpu.dynamic_rotate %27 by %c497_i32_43 dim 1 : vector<8x512xf32>, i32 -> vector<8x512xf32>
    %c48_44 = arith.constant 48 : index
    %c0_45 = arith.constant 0 : index
    %43 = vector.load %arg9[%c48_44, %c0_45] : memref<72x512xf32, #tpu.memory_space<vmem>>, vector<8x512xf32>
    tpu.vector_store %arg9[%c48_44, %c0_45], %42 {strides = array<i32>} : memref<72x512xf32, #tpu.memory_space<vmem>>, vector<8x512xf32>,
    %c496_i32_46 = arith.constant 496 : i32
    %44 = tpu.dynamic_rotate %27 by %c496_i32_46 dim 1 : vector<8x512xf32>, i32 -> vector<8x512xf32>
    %c56_47 = arith.constant 56 : index
    %c0_48 = arith.constant 0 : index
    %45 = vector.load %arg9[%c56_47, %c0_48] : memref<72x512xf32, #tpu.memory_space<vmem>>, vector<8x512xf32>
    tpu.vector_store %arg9[%c56_47, %c0_48], %44 {strides = array<i32>} : memref<72x512xf32, #tpu.memory_space<vmem>>, vector<8x512xf32>,
    %c495_i32_49 = arith.constant 495 : i32
    %46 = tpu.dynamic_rotate %27 by %c495_i32_49 dim 1 : vector<8x512xf32>, i32 -> vector<8x512xf32>
    %c64_50 = arith.constant 64 : index
    %c0_51 = arith.constant 0 : index
    %47 = vector.load %arg9[%c64_50, %c0_51] : memref<72x512xf32, #tpu.memory_space<vmem>>, vector<8x512xf32>
    tpu.vector_store %arg9[%c64_50, %c0_51], %46 {strides = array<i32>} : memref<72x512xf32, #tpu.memory_space<vmem>>, vector<8x512xf32>,
    %c0_52 = arith.constant 0 : index
    %c0_53 = arith.constant 0 : index
    %48 = vector.load %arg9[%c0_52, %c0_53] : memref<72x512xf32, #tpu.memory_space<vmem>>, vector<72x512xf32>
    %49 = arith.mulf %48, %28 : vector<72x512xf32>
    %cst_54 = arith.constant dense<0.000000e+00> : vector<8x512xf32>
    %50 = tpu.matmul %29, %49, %cst_54 {dimension_numbers = #tpu.dot_dimension_numbers<[1], [0], [0], [1], [0, 0, 1, 1], [], []>} : vector<8x72xf32>, vector<72x512xf32>, vector<8x512xf32> -> vector<8x512xf32>
    %51 = vector.broadcast %30 : vector<8x1xf32> to vector<8x512xf32>
    %52 = arith.addf %50, %51 : vector<8x512xf32>
    %cst_55 = arith.constant 0.000000e+00 : f32
    %53 = vector.broadcast %cst_55 : f32 to vector<8x512xf32>
    %54 = arith.maximumf %52, %53 : vector<8x512xf32>
    %55 = vector.extract_strided_slice %27 {offsets = [0, 0], sizes = [1, 512], strides = [1, 1]} : vector<8x512xf32> to vector<1x512xf32>
    %56 = vector.extract_strided_slice %27 {offsets = [3, 0], sizes = [1, 512], strides = [1, 1]} : vector<8x512xf32> to vector<1x512xf32>
    %57 = vector.extract_strided_slice %54 {offsets = [1, 0], sizes = [1, 512], strides = [1, 1]} : vector<8x512xf32> to vector<1x512xf32>
    %58 = vector.extract_strided_slice %54 {offsets = [4, 0], sizes = [1, 512], strides = [1, 1]} : vector<8x512xf32> to vector<1x512xf32>
    %59 = vector.extract_strided_slice %54 {offsets = [7, 0], sizes = [1, 512], strides = [1, 1]} : vector<8x512xf32> to vector<1x512xf32>
    %60 = tpu.concatenate %55, %56, %57, %58, %59 in 0 : vector<1x512xf32>, vector<1x512xf32>, vector<1x512xf32>, vector<1x512xf32>, vector<1x512xf32> -> vector<5x512xf32>
    %c0_56 = arith.constant 0 : index
    %c0_57 = arith.constant 0 : index
    %61 = vector.load %arg7[%c0_56, %c0_57] : memref<5x512xf32, #tpu.memory_space<vmem>>, vector<5x512xf32>
    tpu.vector_store %arg7[%c0_56, %c0_57], %60 {strides = array<i32>} : memref<5x512xf32, #tpu.memory_space<vmem>>, vector<5x512xf32>,
    %62 = vector.extract_strided_slice %54 {offsets = [1, 0], sizes = [2, 512], strides = [1, 1]} : vector<8x512xf32> to vector<2x512xf32>
    %63 = vector.extract_strided_slice %54 {offsets = [7, 0], sizes = [1, 512], strides = [1, 1]} : vector<8x512xf32> to vector<1x512xf32>
    %64 = tpu.concatenate %62, %63 in 0 : vector<2x512xf32>, vector<1x512xf32> -> vector<3x512xf32>
    %c0_58 = arith.constant 0 : index
    %c0_59 = arith.constant 0 : index
    %65 = vector.load %arg8[%c0_58, %c0_59] : memref<3x512xf32, #tpu.memory_space<vmem>>, vector<3x512xf32>
    tpu.vector_store %arg8[%c0_58, %c0_59], %64 {strides = array<i32>} : memref<3x512xf32, #tpu.memory_space<vmem>>, vector<3x512xf32>,
    return
  }
}

</mosaic_0001>

<llo_original>
// kernel: tpu_custom_call.1
$region0: #{tpu_custom_call.1}
  #allocation0 [shape = 'u32[]', space=smem, size = 0x4, offset = 0x4, fixed_abs, tag = 'smem constant byte address 0x4 - core index']
  #allocation1 [shape = 'u32[144,128]{1,0:T(1,128)}', space=vmem, size = 0x12000, scoped, tag = 'internal scratch']
  #allocation2 [shape = 'f32[72,512]{1,0:T(8,128)}', space=vmem, size = 0x24000, scoped, tag = 'scratch operand']
  %s0 = inlined_call_operand.hbm [shape: f32[8,512], index: 0, kind: input, shape index: {}]
  %s1 = inlined_call_operand.vmem [shape: f32[8,72], index: 1, kind: input, shape index: {}]
  %s2 = inlined_call_operand.vmem [shape: f32[8,1], index: 2, kind: input, shape index: {}]
  %s3 = inlined_call_operand.vmem [shape: f32[8,72], index: 3, kind: input, shape index: {}]
  %s4 = inlined_call_operand.vmem [shape: f32[8,1], index: 4, kind: input, shape index: {}]
  %s5 = inlined_call_operand.hbm [shape: f32[72,512], index: 5, kind: input, shape index: {}]
  %s6 = inlined_call_operand.hbm [shape: f32[72,512], index: 6, kind: input, shape index: {}]
  %s7 = inlined_call_operand.hbm [shape: f32[5,512], index: 7, kind: output, shape index: {0}]
  %s8 = inlined_call_operand.hbm [shape: f32[3,512], index: 8, kind: output, shape index: {1}]
  %9 = xla_tuple %s7, %s8
  %s10 = sld [smem:[#allocation0]]
  $region58: #{tpu_custom_call.1} parent=0
    _
  %s12 = ssub.s32 1, %s10
  %s13 = scalar_select 0, %s12, %s10
  $region1: #{tpu_custom_call.1} parent=0
    #allocation3 [shape = 'u8[16384]{0}', space=vmem, size = 0x4000, scoped, tag = 'input window, operand 0, single buffered']
    #allocation4 [shape = 's32[1]{0}', space=sflag, size = 0x4, scoped, tag = 'scoped memory for tpu_custom_call.1']
    #allocation5 [shape = 's32[1]{0}', space=sflag, size = 0x4, scoped, tag = 'scoped memory for tpu_custom_call.1']
    #allocation6 [shape = 'u8[147456]{0}', space=vmem, size = 0x24000, scoped, tag = 'input window, operand 5, single buffered']
    #allocation7 [shape = 's32[1]{0}', space=sflag, size = 0x4, scoped, tag = 'scoped memory for tpu_custom_call.1']
    #allocation8 [shape = 'u8[147456]{0}', space=vmem, size = 0x24000, scoped, tag = 'input window, operand 6, single buffered']
    #allocation9 [shape = 'u8[16384]{0}', space=vmem, size = 0x4000, scoped, tag = 'output window, operand 0, single buffered']
    #allocation10 [shape = 'u8[8192]{0}', space=vmem, size = 0x2000, scoped, tag = 'output window, operand 1, single buffered']
    #allocation11 [shape = 's32[1]{0}', space=sflag, size = 0x4, scoped, tag = 'scoped memory for tpu_custom_call.1']
    %14 = vsyncpa [#allocation4], 0
    %15 = vsyncpa [#allocation7], 0
    %16 = vsyncpa [#allocation5], 0
    %17 = vsyncpa [#allocation11], 0
    // Predicated region
    $region2: #{tpu_custom_call.1} parent=1 // pred_check
      _
    $region3: #{tpu_custom_call.1} parent=1 // pred_check_branch
      %19 = sbr.rel (0) target = $region5
    $region4: #{tpu_custom_call.1} parent=1 // pred_region
      %s21 = ssub.s32 512, 512
      %22 = vsyncadd [#allocation4], %s21
      %s24 = sshll.u32 [#allocation3], 4
      %s25 = int_to_ptr.vmem [resolvable:$true] %s24
      %27 = dma.hbm_to_vmem [thread:$0]  %s0, 512, %s25, [#allocation4]
    $region5: #{tpu_custom_call.1} parent=1 // pred_fallthru
      _
    // Predicated region
    $region6: #{tpu_custom_call.1} parent=1 // pred_check
      _
    $region7: #{tpu_custom_call.1} parent=1 // pred_check_branch
      %29 = sbr.rel (0) target = $region9
    $region8: #{tpu_custom_call.1} parent=1 // pred_region
      _
    $region9: #{tpu_custom_call.1} parent=1 // pred_fallthru
      _
    // Predicated region
    $region10: #{tpu_custom_call.1} parent=1 // pred_check
      _
    $region11: #{tpu_custom_call.1} parent=1 // pred_check_branch
      %31 = sbr.rel (0) target = $region13
    $region12: #{tpu_custom_call.1} parent=1 // pred_region
      _
    $region13: #{tpu_custom_call.1} parent=1 // pred_fallthru
      _
    // Predicated region
    $region14: #{tpu_custom_call.1} parent=1 // pred_check
      _
    $region15: #{tpu_custom_call.1} parent=1 // pred_check_branch
      %33 = sbr.rel (0) target = $region17
    $region16: #{tpu_custom_call.1} parent=1 // pred_region
      _
    $region17: #{tpu_custom_call.1} parent=1 // pred_fallthru
      _
    // Predicated region
    $region18: #{tpu_custom_call.1} parent=1 // pred_check
      _
    $region19: #{tpu_custom_call.1} parent=1 // pred_check_branch
      %35 = sbr.rel (0) target = $region21
    $region20: #{tpu_custom_call.1} parent=1 // pred_region
      _
    $region21: #{tpu_custom_call.1} parent=1 // pred_fallthru
      _
    // Predicated region
    $region22: #{tpu_custom_call.1} parent=1 // pred_check
      _
    $region23: #{tpu_custom_call.1} parent=1 // pred_check_branch
      %37 = sbr.rel (0) target = $region25
    $region24: #{tpu_custom_call.1} parent=1 // pred_region
      %s39 = ssub.s32 4608, 4608
      %40 = vsyncadd [#allocation7], %s39
      %s41 = sshll.u32 [#allocation6], 4
      %s42 = int_to_ptr.vmem [resolvable:$true] %s41
      %47 = dma.hbm_to_vmem [thread:$0]  %s5, 4608, %s42, [#allocation7], 512, 512, 32
    $region25: #{tpu_custom_call.1} parent=1 // pred_fallthru
      _
    // Predicated region
    $region26: #{tpu_custom_call.1} parent=1 // pred_check
      _
    $region27: #{tpu_custom_call.1} parent=1 // pred_check_branch
      %49 = sbr.rel (0) target = $region29
    $region28: #{tpu_custom_call.1} parent=1 // pred_region
      %s51 = ssub.s32 4608, 4608
      %52 = vsyncadd [#allocation7], %s51
      %s53 = sshll.u32 [#allocation8], 4
      %s54 = int_to_ptr.vmem [resolvable:$true] %s53
      %59 = dma.hbm_to_vmem [thread:$0]  %s6, 4608, %s54, [#allocation7], 512, 512, 32
    $region29: #{tpu_custom_call.1} parent=1 // pred_fallthru
      _
    // Predicated region
    $region30: #{tpu_custom_call.1} parent=1 // pred_check
      _
    $region31: #{tpu_custom_call.1} parent=1 // pred_check_branch
      %61 = sbr.rel (0) target = $region33
    $region32: #{tpu_custom_call.1} parent=1 // pred_region
      %62 = dma.done [#allocation4], 512
    $region33: #{tpu_custom_call.1} parent=1 // pred_fallthru
      _
    // Predicated region
    $region34: #{tpu_custom_call.1} parent=1 // pred_check
      _
    $region35: #{tpu_custom_call.1} parent=1 // pred_check_branch
      %64 = sbr.rel (0) target = $region37
    $region36: #{tpu_custom_call.1} parent=1 // pred_region
      %65 = dma.done [#allocation7], 4608
    $region37: #{tpu_custom_call.1} parent=1 // pred_fallthru
      _
    // Predicated region
    $region38: #{tpu_custom_call.1} parent=1 // pred_check
      _
    $region39: #{tpu_custom_call.1} parent=1 // pred_check_branch
      %67 = sbr.rel (0) target = $region41
    $region40: #{tpu_custom_call.1} parent=1 // pred_region
      %68 = dma.done [#allocation7], 4608
    $region41: #{tpu_custom_call.1} parent=1 // pred_fallthru
      _
    %v69 = vld [vmem:[#allocation3] sm:$0xff]
    %v70 = vld [vmem:[#allocation3 + $0x8] sm:$0xff]
    %v71 = vld [vmem:[#allocation3 + $0x10] sm:$0xff]
    %v72 = vld [vmem:[#allocation3 + $0x18] sm:$0xff]
    %v73 = vld [vmem:[#allocation6] sm:$0xff]
    %v74 = vld [vmem:[#allocation6 + $0x8] sm:$0xff]
    %v75 = vld [vmem:[#allocation6 + $0x10] sm:$0xff]
    %v76 = vld [vmem:[#allocation6 + $0x18] sm:$0xff]
    %v77 = vld [vmem:[#allocation6 + $0x20] sm:$0xff]
    %v78 = vld [vmem:[#allocation6 + $0x28] sm:$0xff]
    %v79 = vld [vmem:[#allocation6 + $0x30] sm:$0xff]
    %v80 = vld [vmem:[#allocation6 + $0x38] sm:$0xff]
    %v81 = vld [vmem:[#allocation6 + $0x40] sm:$0xff]
    %v82 = vld [vmem:[#allocation6 + $0x48] sm:$0xff]
    %v83 = vld [vmem:[#allocation6 + $0x50] sm:$0xff]
    %v84 = vld [vmem:[#allocation6 + $0x58] sm:$0xff]
    %v85 = vld [vmem:[#allocation6 + $0x60] sm:$0xff]
    %v86 = vld [vmem:[#allocation6 + $0x68] sm:$0xff]
    %v87 = vld [vmem:[#allocation6 + $0x70] sm:$0xff]
    %v88 = vld [vmem:[#allocation6 + $0x78] sm:$0xff]
    %v89 = vld [vmem:[#allocation6 + $0x80] sm:$0xff]
    %v90 = vld [vmem:[#allocation6 + $0x88] sm:$0xff]
    %v91 = vld [vmem:[#allocation6 + $0x90] sm:$0xff]
    %v92 = vld [vmem:[#allocation6 + $0x98] sm:$0xff]
    %v93 = vld [vmem:[#allocation6 + $0xa0] sm:$0xff]
    %v94 = vld [vmem:[#allocation6 + $0xa8] sm:$0xff]
    %v95 = vld [vmem:[#allocation6 + $0xb0] sm:$0xff]
    %v96 = vld [vmem:[#allocation6 + $0xb8] sm:$0xff]
    %v97 = vld [vmem:[#allocation6 + $0xc0] sm:$0xff]
    %v98 = vld [vmem:[#allocation6 + $0xc8] sm:$0xff]
    %v99 = vld [vmem:[#allocation6 + $0xd0] sm:$0xff]
    %v100 = vld [vmem:[#allocation6 + $0xd8] sm:$0xff]
    %v101 = vld [vmem:[#allocation6 + $0xe0] sm:$0xff]
    %v102 = vld [vmem:[#allocation6 + $0xe8] sm:$0xff]
    %v103 = vld [vmem:[#allocation6 + $0xf0] sm:$0xff]
    %v104 = vld [vmem:[#allocation6 + $0xf8] sm:$0xff]
    %v105 = vld [vmem:[#allocation6 + $0x100] sm:$0xff]
    %v106 = vld [vmem:[#allocation6 + $0x108] sm:$0xff]
    %v107 = vld [vmem:[#allocation6 + $0x110] sm:$0xff]
    %v108 = vld [vmem:[#allocation6 + $0x118] sm:$0xff]
    %v109 = vld [vmem:[%s1] sm:$0xff]
    %v110 = vld [vmem:[%s2] sm:$0xff]
    %111 = vrot.lane.b32.xlu0 %v69, 17
    %v112 = vpop.permute.xlu0 %111
    %113 = vrot.lane.b32.xlu0 %v70, 17
    %v114 = vpop.permute.xlu0 %113
    %115 = vrot.lane.b32.xlu0 %v71, 17
    %v116 = vpop.permute.xlu0 %115
    %117 = vrot.lane.b32.xlu0 %v72, 17
    %v118 = vpop.permute.xlu0 %117
    %v119 = vlaneseq
    %v120 = vand.u32 %v119, 127
    %vm121 = vcmp.lt.s32.totalorder %v120, 17
    %v122 = vsel %vm121, %v116, %v118
    %v123 = vsel %vm121, %v114, %v116
    %v124 = vsel %vm121, %v112, %v114
    %v125 = vsel %vm121, %v118, %v112
    %126 = vst [vmem:[#allocation2] sm:$0xff] %v125
    %127 = vst [vmem:[#allocation2 + $0x8] sm:$0xff] %v124
    %128 = vst [vmem:[#allocation2 + $0x10] sm:$0xff] %v123
    %129 = vst [vmem:[#allocation2 + $0x18] sm:$0xff] %v122
    %130 = vrot.lane.b32.xlu0 %v69, 16
    %v131 = vpop.permute.xlu0 %130
    %132 = vrot.lane.b32.xlu0 %v70, 16
    %v133 = vpop.permute.xlu0 %132
    %134 = vrot.lane.b32.xlu0 %v71, 16
    %v135 = vpop.permute.xlu0 %134
    %136 = vrot.lane.b32.xlu0 %v72, 16
    %v137 = vpop.permute.xlu0 %136
    %vm138 = vcmp.lt.s32.totalorder %v120, 16
    %v139 = vsel %vm138, %v135, %v137
    %v140 = vsel %vm138, %v133, %v135
    %v141 = vsel %vm138, %v131, %v133
    %v142 = vsel %vm138, %v137, %v131
    %143 = vst [vmem:[#allocation2 + $0x20] sm:$0xff] %v142
    %144 = vst [vmem:[#allocation2 + $0x28] sm:$0xff] %v141
    %145 = vst [vmem:[#allocation2 + $0x30] sm:$0xff] %v140
    %146 = vst [vmem:[#allocation2 + $0x38] sm:$0xff] %v139
    %147 = vrot.lane.b32.xlu0 %v69, 15
    %v148 = vpop.permute.xlu0 %147
    %149 = vrot.lane.b32.xlu0 %v70, 15
    %v150 = vpop.permute.xlu0 %149
    %151 = vrot.lane.b32.xlu0 %v71, 15
    %v152 = vpop.permute.xlu0 %151
    %153 = vrot.lane.b32.xlu0 %v72, 15
    %v154 = vpop.permute.xlu0 %153
    %vm155 = vcmp.lt.s32.totalorder %v120, 15
    %v156 = vsel %vm155, %v152, %v154
    %v157 = vsel %vm155, %v150, %v152
    %v158 = vsel %vm155, %v148, %v150
    %v159 = vsel %vm155, %v154, %v148
    %160 = vst [vmem:[#allocation2 + $0x40] sm:$0xff] %v159
    %161 = vst [vmem:[#allocation2 + $0x48] sm:$0xff] %v158
    %162 = vst [vmem:[#allocation2 + $0x50] sm:$0xff] %v157
    %163 = vst [vmem:[#allocation2 + $0x58] sm:$0xff] %v156
    %164 = vrot.lane.b32.xlu0 %v69, 1
    %v165 = vpop.permute.xlu0 %164
    %166 = vrot.lane.b32.xlu0 %v70, 1
    %v167 = vpop.permute.xlu0 %166
    %168 = vrot.lane.b32.xlu0 %v71, 1
    %v169 = vpop.permute.xlu0 %168
    %170 = vrot.lane.b32.xlu0 %v72, 1
    %v171 = vpop.permute.xlu0 %170
    %vm172 = vcmp.lt.s32.totalorder %v120, 1
    %v173 = vsel %vm172, %v169, %v171
    %v174 = vsel %vm172, %v167, %v169
    %v175 = vsel %vm172, %v165, %v167
    %v176 = vsel %vm172, %v171, %v165
    %177 = vst [vmem:[#allocation2 + $0x60] sm:$0xff] %v176
    %178 = vst [vmem:[#allocation2 + $0x68] sm:$0xff] %v175
    %179 = vst [vmem:[#allocation2 + $0x70] sm:$0xff] %v174
    %180 = vst [vmem:[#allocation2 + $0x78] sm:$0xff] %v173
    %181 = vst [vmem:[#allocation2 + $0x80] sm:$0xff] %v69
    %182 = vst [vmem:[#allocation2 + $0x88] sm:$0xff] %v70
    %183 = vst [vmem:[#allocation2 + $0x90] sm:$0xff] %v71
    %184 = vst [vmem:[#allocation2 + $0x98] sm:$0xff] %v72
    %185 = vrot.lane.b32.xlu0 %v69, 127
    %v186 = vpop.permute.xlu0 %185
    %187 = vrot.lane.b32.xlu0 %v70, 127
    %v188 = vpop.permute.xlu0 %187
    %189 = vrot.lane.b32.xlu0 %v71, 127
    %v190 = vpop.permute.xlu0 %189
    %191 = vrot.lane.b32.xlu0 %v72, 127
    %v192 = vpop.permute.xlu0 %191
    %vm193 = vcmp.lt.s32.totalorder %v120, 127
    %v194 = vsel %vm193, %v190, %v192
    %v195 = vsel %vm193, %v188, %v190
    %v196 = vsel %vm193, %v186, %v188
    %v197 = vsel %vm193, %v192, %v186
    %198 = vst [vmem:[#allocation2 + $0xa0] sm:$0xff] %v196
    %199 = vst [vmem:[#allocation2 + $0xa8] sm:$0xff] %v195
    %200 = vst [vmem:[#allocation2 + $0xb0] sm:$0xff] %v194
    %201 = vst [vmem:[#allocation2 + $0xb8] sm:$0xff] %v197
    %202 = vrot.lane.b32.xlu0 %v69, 113
    %v203 = vpop.permute.xlu0 %202
    %204 = vrot.lane.b32.xlu0 %v70, 113
    %v205 = vpop.permute.xlu0 %204
    %206 = vrot.lane.b32.xlu0 %v71, 113
    %v207 = vpop.permute.xlu0 %206
    %208 = vrot.lane.b32.xlu0 %v72, 113
    %v209 = vpop.permute.xlu0 %208
    %vm210 = vcmp.lt.s32.totalorder %v120, 113
    %v211 = vsel %vm210, %v207, %v209
    %v212 = vsel %vm210, %v205, %v207
    %v213 = vsel %vm210, %v203, %v205
    %v214 = vsel %vm210, %v209, %v203
    %215 = vst [vmem:[#allocation2 + $0xc0] sm:$0xff] %v213
    %216 = vst [vmem:[#allocation2 + $0xc8] sm:$0xff] %v212
    %217 = vst [vmem:[#allocation2 + $0xd0] sm:$0xff] %v211
    %218 = vst [vmem:[#allocation2 + $0xd8] sm:$0xff] %v214
    %219 = vrot.lane.b32.xlu0 %v69, 112
    %v220 = vpop.permute.xlu0 %219
    %221 = vrot.lane.b32.xlu0 %v70, 112
    %v222 = vpop.permute.xlu0 %221
    %223 = vrot.lane.b32.xlu0 %v71, 112
    %v224 = vpop.permute.xlu0 %223
    %225 = vrot.lane.b32.xlu0 %v72, 112
    %v226 = vpop.permute.xlu0 %225
    %vm227 = vcmp.lt.s32.totalorder %v120, 112
    %v228 = vsel %vm227, %v224, %v226
    %v229 = vsel %vm227, %v222, %v224
    %v230 = vsel %vm227, %v220, %v222
    %v231 = vsel %vm227, %v226, %v220
    %232 = vst [vmem:[#allocation2 + $0xe0] sm:$0xff] %v230
    %233 = vst [vmem:[#allocation2 + $0xe8] sm:$0xff] %v229
    %234 = vst [vmem:[#allocation2 + $0xf0] sm:$0xff] %v228
    %235 = vst [vmem:[#allocation2 + $0xf8] sm:$0xff] %v231
    %236 = vrot.lane.b32.xlu0 %v69, 111
    %v237 = vpop.permute.xlu0 %236
    %238 = vrot.lane.b32.xlu0 %v70, 111
    %v239 = vpop.permute.xlu0 %238
    %240 = vrot.lane.b32.xlu0 %v71, 111
    %v241 = vpop.permute.xlu0 %240
    %242 = vrot.lane.b32.xlu0 %v72, 111
    %v243 = vpop.permute.xlu0 %242
    %vm244 = vcmp.lt.s32.totalorder %v120, 111
    %v245 = vsel %vm244, %v241, %v243
    %v246 = vsel %vm244, %v239, %v241
    %v247 = vsel %vm244, %v237, %v239
    %v248 = vsel %vm244, %v243, %v237
    %249 = vst [vmem:[#allocation2 + $0x100] sm:$0xff] %v247
    %250 = vst [vmem:[#allocation2 + $0x108] sm:$0xff] %v246
    %251 = vst [vmem:[#allocation2 + $0x110] sm:$0xff] %v245
    %252 = vst [vmem:[#allocation2 + $0x118] sm:$0xff] %v248
    %v253 = vld [vmem:[#allocation2] sm:$0xff]
    %v254 = vld [vmem:[#allocation2 + $0x8] sm:$0xff]
    %v255 = vld [vmem:[#allocation2 + $0x10] sm:$0xff]
    %v256 = vld [vmem:[#allocation2 + $0x18] sm:$0xff]
    %v257 = vld [vmem:[#allocation2 + $0x20] sm:$0xff]
    %v258 = vld [vmem:[#allocation2 + $0x28] sm:$0xff]
    %v259 = vld [vmem:[#allocation2 + $0x30] sm:$0xff]
    %v260 = vld [vmem:[#allocation2 + $0x38] sm:$0xff]
    %v261 = vld [vmem:[#allocation2 + $0x40] sm:$0xff]
    %v262 = vld [vmem:[#allocation2 + $0x48] sm:$0xff]
    %v263 = vld [vmem:[#allocation2 + $0x50] sm:$0xff]
    %v264 = vld [vmem:[#allocation2 + $0x58] sm:$0xff]
    %v265 = vld [vmem:[#allocation2 + $0x60] sm:$0xff]
    %v266 = vld [vmem:[#allocation2 + $0x68] sm:$0xff]
    %v267 = vld [vmem:[#allocation2 + $0x70] sm:$0xff]
    %v268 = vld [vmem:[#allocation2 + $0x78] sm:$0xff]
    %v269 = vld [vmem:[#allocation2 + $0x80] sm:$0xff]
    %v270 = vld [vmem:[#allocation2 + $0x88] sm:$0xff]
    %v271 = vld [vmem:[#allocation2 + $0x90] sm:$0xff]
    %v272 = vld [vmem:[#allocation2 + $0x98] sm:$0xff]
    %v273 = vld [vmem:[#allocation2 + $0xa0] sm:$0xff]
    %v274 = vld [vmem:[#allocation2 + $0xa8] sm:$0xff]
    %v275 = vld [vmem:[#allocation2 + $0xb0] sm:$0xff]
    %v276 = vld [vmem:[#allocation2 + $0xb8] sm:$0xff]
    %v277 = vld [vmem:[#allocation2 + $0xc0] sm:$0xff]
    %v278 = vld [vmem:[#allocation2 + $0xc8] sm:$0xff]
    %v279 = vld [vmem:[#allocation2 + $0xd0] sm:$0xff]
    %v280 = vld [vmem:[#allocation2 + $0xd8] sm:$0xff]
    %v281 = vld [vmem:[#allocation2 + $0xe0] sm:$0xff]
    %v282 = vld [vmem:[#allocation2 + $0xe8] sm:$0xff]
    %v283 = vld [vmem:[#allocation2 + $0xf0] sm:$0xff]
    %v284 = vld [vmem:[#allocation2 + $0xf8] sm:$0xff]
    %v285 = vld [vmem:[#allocation2 + $0x100] sm:$0xff]
    %v286 = vld [vmem:[#allocation2 + $0x108] sm:$0xff]
    %v287 = vld [vmem:[#allocation2 + $0x110] sm:$0xff]
    %v288 = vld [vmem:[#allocation2 + $0x118] sm:$0xff]
    %v289 = vmul.f32 %v253, %v73
    %v290 = vmul.f32 %v254, %v74
    %v291 = vmul.f32 %v255, %v75
    %v292 = vmul.f32 %v256, %v76
    %v293 = vmul.f32 %v257, %v77
    %v294 = vmul.f32 %v258, %v78
    %v295 = vmul.f32 %v259, %v79
    %v296 = vmul.f32 %v260, %v80
    %v297 = vmul.f32 %v261, %v81
    %v298 = vmul.f32 %v262, %v82
    %v299 = vmul.f32 %v263, %v83
    %v300 = vmul.f32 %v264, %v84
    %v301 = vmul.f32 %v265, %v85
    %v302 = vmul.f32 %v266, %v86
    %v303 = vmul.f32 %v267, %v87
    %v304 = vmul.f32 %v268, %v88
    %v305 = vmul.f32 %v269, %v89
    %v306 = vmul.f32 %v270, %v90
    %v307 = vmul.f32 %v271, %v91
    %v308 = vmul.f32 %v272, %v92
    %v309 = vmul.f32 %v273, %v93
    %v310 = vmul.f32 %v274, %v94
    %v311 = vmul.f32 %v275, %v95
    %v312 = vmul.f32 %v276, %v96
    %v313 = vmul.f32 %v277, %v97
    %v314 = vmul.f32 %v278, %v98
    %v315 = vmul.f32 %v279, %v99
    %v316 = vmul.f32 %v280, %v100
    %v317 = vmul.f32 %v281, %v101
    %v318 = vmul.f32 %v282, %v102
    %v319 = vmul.f32 %v283, %v103
    %v320 = vmul.f32 %v284, %v104
    %v321 = vmul.f32 %v285, %v105
    %v322 = vmul.f32 %v286, %v106
    %v323 = vmul.f32 %v287, %v107
    %v324 = vmul.f32 %v288, %v108
    %326 = vset.pattern.permute.xlu0 0
    %327 = vperm.xlu0 %326, %v110
    %v328 = vpop.permute.xlu0 %327
    %vm330 = vcmask 588800
    %v332 = vsel %vm330, %v109, 0
    %334 = vmatprep.subr.mxu0 0.0
    %335 = vmatpush1.msra.mxu0 0.0
    %336 = vmatprep.subr.mxu0 0.0
    %337 = vmatpush1.msra.mxu0 0.0
    %338 = vmatprep.subr.mxu0 0.0
    %339 = vmatpush1.msra.mxu0 0.0
    %340 = vmatprep.subr.mxu0 0.0
    %341 = vmatpush1.msra.mxu0 0.0
    %342 = vmatprep.subr.mxu0 0.0
    %343 = vmatpush1.msra.mxu0 0.0
    %344 = vmatprep.subr.mxu0 0.0
    %345 = vmatpush1.msra.mxu0 0.0
    %346 = vmatprep.subr.mxu0 0.0
    %347 = vmatpush1.msra.mxu0 0.0
    %348 = vmatprep.subr.mxu0 %v322
    %349 = vmatpush1.msra.mxu0 %v321
    %350 = vmatprep.subr.mxu0 %v318
    %351 = vmatpush1.msra.mxu0 %v317
    %352 = vmatprep.subr.mxu0 %v314
    %353 = vmatpush1.msra.mxu0 %v313
    %354 = vmatprep.subr.mxu0 %v310
    %355 = vmatpush1.msra.mxu0 %v309
    %356 = vmatprep.subr.mxu0 %v306
    %357 = vmatpush1.msra.mxu0 %v305
    %358 = vmatprep.subr.mxu0 %v302
    %359 = vmatpush1.msra.mxu0 %v301
    %360 = vmatprep.subr.mxu0 %v298
    %361 = vmatpush1.msra.mxu0 %v297
    %362 = vmatprep.subr.mxu0 %v294
    %363 = vmatpush1.msra.mxu0 %v293
    %364 = vmatprep.subr.mxu0 %v290
    %365 = vmatpush1.msra.mxu0 %v289
    %366 = vmatprep.subr.mxu0 0.0
    %367 = vmatpush2.msra.mxu0 0.0
    %368 = vmatprep.subr.mxu0 0.0
    %369 = vmatpush2.msra.mxu0 0.0
    %370 = vmatprep.subr.mxu0 0.0
    %371 = vmatpush2.msra.mxu0 0.0
    %372 = vmatprep.subr.mxu0 0.0
    %373 = vmatpush2.msra.mxu0 0.0
    %374 = vmatprep.subr.mxu0 0.0
    %375 = vmatpush2.msra.mxu0 0.0
    %376 = vmatprep.subr.mxu0 0.0
    %377 = vmatpush2.msra.mxu0 0.0
    %378 = vmatprep.subr.mxu0 0.0
    %379 = vmatpush2.msra.mxu0 0.0
    %380 = vmatprep.subr.mxu0 0.0
    %381 = vmatpush2.msra.mxu0 0.0
    %382 = vmatprep.subr.mxu0 0.0
    %383 = vmatpush2.msra.mxu0 0.0
    %384 = vmatprep.subr.mxu0 0.0
    %385 = vmatpush2.msra.mxu0 0.0
    %386 = vmatprep.subr.mxu0 0.0
    %387 = vmatpush2.msra.mxu0 0.0
    %388 = vmatprep.subr.mxu0 0.0
    %389 = vmatpush2.msra.mxu0 0.0
    %390 = vmatprep.subr.mxu0 0.0
    %391 = vmatpush2.msra.mxu0 0.0
    %392 = vmatprep.subr.mxu0 0.0
    %393 = vmatpush2.msra.mxu0 0.0
    %394 = vmatprep.subr.mxu0 0.0
    %395 = vmatpush2.msra.mxu0 0.0
    %396 = vmatprep.subr.mxu0 0.0
    %397 = vmatpush2.msra.mxu0 0.0
    %398 = vmatprep.mubr.f32.mxu0 0.0
    %399 = vmatmul.mubr.f32.gmra.mxu0 %v332
    %v400 = vpop.f32.mrf.mxu0
    %v401 = vadd.f32 %v328, %v400
    %v402 = vpop.f32.mrf.mxu0
    %v403 = vadd.f32 %v328, %v402
    %404 = vdwg.mxu0
    %405 = vmatprep.subr.mxu0 0.0
    %406 = vmatpush1.msra.mxu0 0.0
    %407 = vmatprep.subr.mxu0 0.0
    %408 = vmatpush1.msra.mxu0 0.0
    %409 = vmatprep.subr.mxu0 0.0
    %410 = vmatpush1.msra.mxu0 0.0
    %411 = vmatprep.subr.mxu0 0.0
    %412 = vmatpush1.msra.mxu0 0.0
    %413 = vmatprep.subr.mxu0 0.0
    %414 = vmatpush1.msra.mxu0 0.0
    %415 = vmatprep.subr.mxu0 0.0
    %416 = vmatpush1.msra.mxu0 0.0
    %417 = vmatprep.subr.mxu0 0.0
    %418 = vmatpush1.msra.mxu0 0.0
    %419 = vmatprep.subr.mxu0 %v324
    %420 = vmatpush1.msra.mxu0 %v323
    %421 = vmatprep.subr.mxu0 %v320
    %422 = vmatpush1.msra.mxu0 %v319
    %423 = vmatprep.subr.mxu0 %v316
    %424 = vmatpush1.msra.mxu0 %v315
    %425 = vmatprep.subr.mxu0 %v312
    %426 = vmatpush1.msra.mxu0 %v311
    %427 = vmatprep.subr.mxu0 %v308
    %428 = vmatpush1.msra.mxu0 %v307
    %429 = vmatprep.subr.mxu0 %v304
    %430 = vmatpush1.msra.mxu0 %v303
    %431 = vmatprep.subr.mxu0 %v300
    %432 = vmatpush1.msra.mxu0 %v299
    %433 = vmatprep.subr.mxu0 %v296
    %434 = vmatpush1.msra.mxu0 %v295
    %435 = vmatprep.subr.mxu0 %v292
    %436 = vmatpush1.msra.mxu0 %v291
    %437 = vmatprep.subr.mxu0 0.0
    %438 = vmatpush2.msra.mxu0 0.0
    %439 = vmatprep.subr.mxu0 0.0
    %440 = vmatpush2.msra.mxu0 0.0
    %441 = vmatprep.subr.mxu0 0.0
    %442 = vmatpush2.msra.mxu0 0.0
    %443 = vmatprep.subr.mxu0 0.0
    %444 = vmatpush2.msra.mxu0 0.0
    %445 = vmatprep.subr.mxu0 0.0
    %446 = vmatpush2.msra.mxu0 0.0
    %447 = vmatprep.subr.mxu0 0.0
    %448 = vmatpush2.msra.mxu0 0.0
    %449 = vmatprep.subr.mxu0 0.0
    %450 = vmatpush2.msra.mxu0 0.0
    %451 = vmatprep.subr.mxu0 0.0
    %452 = vmatpush2.msra.mxu0 0.0
    %453 = vmatprep.subr.mxu0 0.0
    %454 = vmatpush2.msra.mxu0 0.0
    %455 = vmatprep.subr.mxu0 0.0
    %456 = vmatpush2.msra.mxu0 0.0
    %457 = vmatprep.subr.mxu0 0.0
    %458 = vmatpush2.msra.mxu0 0.0
    %459 = vmatprep.subr.mxu0 0.0
    %460 = vmatpush2.msra.mxu0 0.0
    %461 = vmatprep.subr.mxu0 0.0
    %462 = vmatpush2.msra.mxu0 0.0
    %463 = vmatprep.subr.mxu0 0.0
    %464 = vmatpush2.msra.mxu0 0.0
    %465 = vmatprep.subr.mxu0 0.0
    %466 = vmatpush2.msra.mxu0 0.0
    %467 = vmatprep.subr.mxu0 0.0
    %468 = vmatpush2.msra.mxu0 0.0
    %469 = vmatprep.mubr.f32.mxu0 0.0
    %470 = vmatmul.mubr.f32.gmra.mxu0 %v332
    %v471 = vpop.f32.mrf.mxu0
    %v472 = vadd.f32 %v328, %v471
    %v473 = vpop.f32.mrf.mxu0
    %v474 = vadd.f32 %v328, %v473
    %475 = vdwg.mxu0
    %v476 = vmax.f32 %v401, 0.0
    %v477 = vmax.f32 %v403, 0.0
    %v478 = vmax.f32 %v472, 0.0
    %v479 = vmax.f32 %v474, 0.0
    %v480 = vld [vmem:[#allocation8] sm:$0xff]
    %v481 = vld [vmem:[#allocation8 + $0x8] sm:$0xff]
    %v482 = vld [vmem:[#allocation8 + $0x10] sm:$0xff]
    %v483 = vld [vmem:[#allocation8 + $0x18] sm:$0xff]
    %v484 = vld [vmem:[#allocation8 + $0x20] sm:$0xff]
    %v485 = vld [vmem:[#allocation8 + $0x28] sm:$0xff]
    %v486 = vld [vmem:[#allocation8 + $0x30] sm:$0xff]
    %v487 = vld [vmem:[#allocation8 + $0x38] sm:$0xff]
    %v488 = vld [vmem:[#allocation8 + $0x40] sm:$0xff]
    %v489 = vld [vmem:[#allocation8 + $0x48] sm:$0xff]
    %v490 = vld [vmem:[#allocation8 + $0x50] sm:$0xff]
    %v491 = vld [vmem:[#allocation8 + $0x58] sm:$0xff]
    %v492 = vld [vmem:[#allocation8 + $0x60] sm:$0xff]
    %v493 = vld [vmem:[#allocation8 + $0x68] sm:$0xff]
    %v494 = vld [vmem:[#allocation8 + $0x70] sm:$0xff]
    %v495 = vld [vmem:[#allocation8 + $0x78] sm:$0xff]
    %v496 = vld [vmem:[#allocation8 + $0x80] sm:$0xff]
    %v497 = vld [vmem:[#allocation8 + $0x88] sm:$0xff]
    %v498 = vld [vmem:[#allocation8 + $0x90] sm:$0xff]
    %v499 = vld [vmem:[#allocation8 + $0x98] sm:$0xff]
    %v500 = vld [vmem:[#allocation8 + $0xa0] sm:$0xff]
    %v501 = vld [vmem:[#allocation8 + $0xa8] sm:$0xff]
    %v502 = vld [vmem:[#allocation8 + $0xb0] sm:$0xff]
    %v503 = vld [vmem:[#allocation8 + $0xb8] sm:$0xff]
    %v504 = vld [vmem:[#allocation8 + $0xc0] sm:$0xff]
    %v505 = vld [vmem:[#allocation8 + $0xc8] sm:$0xff]
    %v506 = vld [vmem:[#allocation8 + $0xd0] sm:$0xff]
    %v507 = vld [vmem:[#allocation8 + $0xd8] sm:$0xff]
    %v508 = vld [vmem:[#allocation8 + $0xe0] sm:$0xff]
    %v509 = vld [vmem:[#allocation8 + $0xe8] sm:$0xff]
    %v510 = vld [vmem:[#allocation8 + $0xf0] sm:$0xff]
    %v511 = vld [vmem:[#allocation8 + $0xf8] sm:$0xff]
    %v512 = vld [vmem:[#allocation8 + $0x100] sm:$0xff]
    %v513 = vld [vmem:[#allocation8 + $0x108] sm:$0xff]
    %v514 = vld [vmem:[#allocation8 + $0x110] sm:$0xff]
    %v515 = vld [vmem:[#allocation8 + $0x118] sm:$0xff]
    %v516 = vld [vmem:[%s3] sm:$0xff]
    %v517 = vld [vmem:[%s4] sm:$0xff]
    %518 = vrot.lane.b32.xlu0 %v476, 17
    %v519 = vpop.permute.xlu0 %518
    %520 = vrot.lane.b32.xlu0 %v477, 17
    %v521 = vpop.permute.xlu0 %520
    %522 = vrot.lane.b32.xlu0 %v478, 17
    %v523 = vpop.permute.xlu0 %522
    %524 = vrot.lane.b32.xlu0 %v479, 17
    %v525 = vpop.permute.xlu0 %524
    %v526 = vsel %vm121, %v523, %v525
    %v527 = vsel %vm121, %v521, %v523
    %v528 = vsel %vm121, %v519, %v521
    %v529 = vsel %vm121, %v525, %v519
    %530 = vst [vmem:[#allocation2] sm:$0xff] %v529
    %531 = vst [vmem:[#allocation2 + $0x8] sm:$0xff] %v528
    %532 = vst [vmem:[#allocation2 + $0x10] sm:$0xff] %v527
    %533 = vst [vmem:[#allocation2 + $0x18] sm:$0xff] %v526
    %534 = vrot.lane.b32.xlu0 %v476, 16
    %v535 = vpop.permute.xlu0 %534
    %536 = vrot.lane.b32.xlu0 %v477, 16
    %v537 = vpop.permute.xlu0 %536
    %538 = vrot.lane.b32.xlu0 %v478, 16
    %v539 = vpop.permute.xlu0 %538
    %540 = vrot.lane.b32.xlu0 %v479, 16
    %v541 = vpop.permute.xlu0 %540
    %v542 = vsel %vm138, %v539, %v541
    %v543 = vsel %vm138, %v537, %v539
    %v544 = vsel %vm138, %v535, %v537
    %v545 = vsel %vm138, %v541, %v535
    %546 = vst [vmem:[#allocation2 + $0x20] sm:$0xff] %v545
    %547 = vst [vmem:[#allocation2 + $0x28] sm:$0xff] %v544
    %548 = vst [vmem:[#allocation2 + $0x30] sm:$0xff] %v543
    %549 = vst [vmem:[#allocation2 + $0x38] sm:$0xff] %v542
    %550 = vrot.lane.b32.xlu0 %v476, 15
    %v551 = vpop.permute.xlu0 %550
    %552 = vrot.lane.b32.xlu0 %v477, 15
    %v553 = vpop.permute.xlu0 %552
    %554 = vrot.lane.b32.xlu0 %v478, 15
    %v555 = vpop.permute.xlu0 %554
    %556 = vrot.lane.b32.xlu0 %v479, 15
    %v557 = vpop.permute.xlu0 %556
    %v558 = vsel %vm155, %v555, %v557
    %v559 = vsel %vm155, %v553, %v555
    %v560 = vsel %vm155, %v551, %v553
    %v561 = vsel %vm155, %v557, %v551
    %562 = vst [vmem:[#allocation2 + $0x40] sm:$0xff] %v561
    %563 = vst [vmem:[#allocation2 + $0x48] sm:$0xff] %v560
    %564 = vst [vmem:[#allocation2 + $0x50] sm:$0xff] %v559
    %565 = vst [vmem:[#allocation2 + $0x58] sm:$0xff] %v558
    %566 = vrot.lane.b32.xlu0 %v476, 1
    %v567 = vpop.permute.xlu0 %566
    %568 = vrot.lane.b32.xlu0 %v477, 1
    %v569 = vpop.permute.xlu0 %568
    %570 = vrot.lane.b32.xlu0 %v478, 1
    %v571 = vpop.permute.xlu0 %570
    %572 = vrot.lane.b32.xlu0 %v479, 1
    %v573 = vpop.permute.xlu0 %572
    %v574 = vsel %vm172, %v571, %v573
    %v575 = vsel %vm172, %v569, %v571
    %v576 = vsel %vm172, %v567, %v569
    %v577 = vsel %vm172, %v573, %v567
    %578 = vst [vmem:[#allocation2 + $0x60] sm:$0xff] %v577
    %579 = vst [vmem:[#allocation2 + $0x68] sm:$0xff] %v576
    %580 = vst [vmem:[#allocation2 + $0x70] sm:$0xff] %v575
    %581 = vst [vmem:[#allocation2 + $0x78] sm:$0xff] %v574
    %582 = vst [vmem:[#allocation2 + $0x80] sm:$0xff] %v476
    %583 = vst [vmem:[#allocation2 + $0x88] sm:$0xff] %v477
    %584 = vst [vmem:[#allocation2 + $0x90] sm:$0xff] %v478
    %585 = vst [vmem:[#allocation2 + $0x98] sm:$0xff] %v479
    %586 = vrot.lane.b32.xlu0 %v476, 127
    %v587 = vpop.permute.xlu0 %586
    %588 = vrot.lane.b32.xlu0 %v477, 127
    %v589 = vpop.permute.xlu0 %588
    %590 = vrot.lane.b32.xlu0 %v478, 127
    %v591 = vpop.permute.xlu0 %590
    %592 = vrot.lane.b32.xlu0 %v479, 127
    %v593 = vpop.permute.xlu0 %592
    %v594 = vsel %vm193, %v591, %v593
    %v595 = vsel %vm193, %v589, %v591
    %v596 = vsel %vm193, %v587, %v589
    %v597 = vsel %vm193, %v593, %v587
    %598 = vst [vmem:[#allocation2 + $0xa0] sm:$0xff] %v596
    %599 = vst [vmem:[#allocation2 + $0xa8] sm:$0xff] %v595
    %600 = vst [vmem:[#allocation2 + $0xb0] sm:$0xff] %v594
    %601 = vst [vmem:[#allocation2 + $0xb8] sm:$0xff] %v597
    %602 = vrot.lane.b32.xlu0 %v476, 113
    %v603 = vpop.permute.xlu0 %602
    %604 = vrot.lane.b32.xlu0 %v477, 113
    %v605 = vpop.permute.xlu0 %604
    %606 = vrot.lane.b32.xlu0 %v478, 113
    %v607 = vpop.permute.xlu0 %606
    %608 = vrot.lane.b32.xlu0 %v479, 113
    %v609 = vpop.permute.xlu0 %608
    %v610 = vsel %vm210, %v607, %v609
    %v611 = vsel %vm210, %v605, %v607
    %v612 = vsel %vm210, %v603, %v605
    %v613 = vsel %vm210, %v609, %v603
    %614 = vst [vmem:[#allocation2 + $0xc0] sm:$0xff] %v612
    %615 = vst [vmem:[#allocation2 + $0xc8] sm:$0xff] %v611
    %616 = vst [vmem:[#allocation2 + $0xd0] sm:$0xff] %v610
    %617 = vst [vmem:[#allocation2 + $0xd8] sm:$0xff] %v613
    %618 = vrot.lane.b32.xlu0 %v476, 112
    %v619 = vpop.permute.xlu0 %618
    %620 = vrot.lane.b32.xlu0 %v477, 112
    %v621 = vpop.permute.xlu0 %620
    %622 = vrot.lane.b32.xlu0 %v478, 112
    %v623 = vpop.permute.xlu0 %622
    %624 = vrot.lane.b32.xlu0 %v479, 112
    %v625 = vpop.permute.xlu0 %624
    %v626 = vsel %vm227, %v623, %v625
    %v627 = vsel %vm227, %v621, %v623
    %v628 = vsel %vm227, %v619, %v621
    %v629 = vsel %vm227, %v625, %v619
    %630 = vst [vmem:[#allocation2 + $0xe0] sm:$0xff] %v628
    %631 = vst [vmem:[#allocation2 + $0xe8] sm:$0xff] %v627
    %632 = vst [vmem:[#allocation2 + $0xf0] sm:$0xff] %v626
    %633 = vst [vmem:[#allocation2 + $0xf8] sm:$0xff] %v629
    %634 = vrot.lane.b32.xlu0 %v476, 111
    %v635 = vpop.permute.xlu0 %634
    %636 = vrot.lane.b32.xlu0 %v477, 111
    %v637 = vpop.permute.xlu0 %636
    %638 = vrot.lane.b32.xlu0 %v478, 111
    %v639 = vpop.permute.xlu0 %638
    %640 = vrot.lane.b32.xlu0 %v479, 111
    %v641 = vpop.permute.xlu0 %640
    %v642 = vsel %vm244, %v639, %v641
    %v643 = vsel %vm244, %v637, %v639
    %v644 = vsel %vm244, %v635, %v637
    %v645 = vsel %vm244, %v641, %v635
    %646 = vst [vmem:[#allocation2 + $0x100] sm:$0xff] %v644
    %647 = vst [vmem:[#allocation2 + $0x108] sm:$0xff] %v643
    %648 = vst [vmem:[#allocation2 + $0x110] sm:$0xff] %v642
    %649 = vst [vmem:[#allocation2 + $0x118] sm:$0xff] %v645
    %v650 = vld [vmem:[#allocation2] sm:$0xff]
    %v651 = vld [vmem:[#allocation2 + $0x8] sm:$0xff]
    %v652 = vld [vmem:[#allocation2 + $0x10] sm:$0xff]
    %v653 = vld [vmem:[#allocation2 + $0x18] sm:$0xff]
    %v654 = vld [vmem:[#allocation2 + $0x20] sm:$0xff]
    %v655 = vld [vmem:[#allocation2 + $0x28] sm:$0xff]
    %v656 = vld [vmem:[#allocation2 + $0x30] sm:$0xff]
    %v657 = vld [vmem:[#allocation2 + $0x38] sm:$0xff]
    %v658 = vld [vmem:[#allocation2 + $0x40] sm:$0xff]
    %v659 = vld [vmem:[#allocation2 + $0x48] sm:$0xff]
    %v660 = vld [vmem:[#allocation2 + $0x50] sm:$0xff]
    %v661 = vld [vmem:[#allocation2 + $0x58] sm:$0xff]
    %v662 = vld [vmem:[#allocation2 + $0x60] sm:$0xff]
    %v663 = vld [vmem:[#allocation2 + $0x68] sm:$0xff]
    %v664 = vld [vmem:[#allocation2 + $0x70] sm:$0xff]
    %v665 = vld [vmem:[#allocation2 + $0x78] sm:$0xff]
    %v666 = vld [vmem:[#allocation2 + $0x80] sm:$0xff]
    %v667 = vld [vmem:[#allocation2 + $0x88] sm:$0xff]
    %v668 = vld [vmem:[#allocation2 + $0x90] sm:$0xff]
    %v669 = vld [vmem:[#allocation2 + $0x98] sm:$0xff]
    %v670 = vld [vmem:[#allocation2 + $0xa0] sm:$0xff]
    %v671 = vld [vmem:[#allocation2 + $0xa8] sm:$0xff]
    %v672 = vld [vmem:[#allocation2 + $0xb0] sm:$0xff]
    %v673 = vld [vmem:[#allocation2 + $0xb8] sm:$0xff]
    %v674 = vld [vmem:[#allocation2 + $0xc0] sm:$0xff]
    %v675 = vld [vmem:[#allocation2 + $0xc8] sm:$0xff]
    %v676 = vld [vmem:[#allocation2 + $0xd0] sm:$0xff]
    %v677 = vld [vmem:[#allocation2 + $0xd8] sm:$0xff]
    %v678 = vld [vmem:[#allocation2 + $0xe0] sm:$0xff]
    %v679 = vld [vmem:[#allocation2 + $0xe8] sm:$0xff]
    %v680 = vld [vmem:[#allocation2 + $0xf0] sm:$0xff]
    %v681 = vld [vmem:[#allocation2 + $0xf8] sm:$0xff]
    %v682 = vld [vmem:[#allocation2 + $0x100] sm:$0xff]
    %v683 = vld [vmem:[#allocation2 + $0x108] sm:$0xff]
    %v684 = vld [vmem:[#allocation2 + $0x110] sm:$0xff]
    %v685 = vld [vmem:[#allocation2 + $0x118] sm:$0xff]
    %v686 = vmul.f32 %v650, %v480
    %v687 = vmul.f32 %v651, %v481
    %v688 = vmul.f32 %v652, %v482
    %v689 = vmul.f32 %v653, %v483
    %v690 = vmul.f32 %v654, %v484
    %v691 = vmul.f32 %v655, %v485
    %v692 = vmul.f32 %v656, %v486
    %v693 = vmul.f32 %v657, %v487
    %v694 = vmul.f32 %v658, %v488
    %v695 = vmul.f32 %v659, %v489
    %v696 = vmul.f32 %v660, %v490
    %v697 = vmul.f32 %v661, %v491
    %v698 = vmul.f32 %v662, %v492
    %v699 = vmul.f32 %v663, %v493
    %v700 = vmul.f32 %v664, %v494
    %v701 = vmul.f32 %v665, %v495
    %v702 = vmul.f32 %v666, %v496
    %v703 = vmul.f32 %v667, %v497
    %v704 = vmul.f32 %v668, %v498
    %v705 = vmul.f32 %v669, %v499
    %v706 = vmul.f32 %v670, %v500
    %v707 = vmul.f32 %v671, %v501
    %v708 = vmul.f32 %v672, %v502
    %v709 = vmul.f32 %v673, %v503
    %v710 = vmul.f32 %v674, %v504
    %v711 = vmul.f32 %v675, %v505
    %v712 = vmul.f32 %v676, %v506
    %v713 = vmul.f32 %v677, %v507
    %v714 = vmul.f32 %v678, %v508
    %v715 = vmul.f32 %v679, %v509
    %v716 = vmul.f32 %v680, %v510
    %v717 = vmul.f32 %v681, %v511
    %v718 = vmul.f32 %v682, %v512
    %v719 = vmul.f32 %v683, %v513
    %v720 = vmul.f32 %v684, %v514
    %v721 = vmul.f32 %v685, %v515
    %723 = vset.pattern.permute.xlu0 0
    %724 = vperm.xlu0 %723, %v517
    %v725 = vpop.permute.xlu0 %724
    %v728 = vsel %vm330, %v516, 0
    %730 = vmatprep.subr.mxu0 0.0
    %731 = vmatpush1.msra.mxu0 0.0
    %732 = vmatprep.subr.mxu0 0.0
    %733 = vmatpush1.msra.mxu0 0.0
    %734 = vmatprep.subr.mxu0 0.0
    %735 = vmatpush1.msra.mxu0 0.0
    %736 = vmatprep.subr.mxu0 0.0
    %737 = vmatpush1.msra.mxu0 0.0
    %738 = vmatprep.subr.mxu0 0.0
    %739 = vmatpush1.msra.mxu0 0.0
    %740 = vmatprep.subr.mxu0 0.0
    %741 = vmatpush1.msra.mxu0 0.0
    %742 = vmatprep.subr.mxu0 0.0
    %743 = vmatpush1.msra.mxu0 0.0
    %744 = vmatprep.subr.mxu0 %v719
    %745 = vmatpush1.msra.mxu0 %v718
    %746 = vmatprep.subr.mxu0 %v715
    %747 = vmatpush1.msra.mxu0 %v714
    %748 = vmatprep.subr.mxu0 %v711
    %749 = vmatpush1.msra.mxu0 %v710
    %750 = vmatprep.subr.mxu0 %v707
    %751 = vmatpush1.msra.mxu0 %v706
    %752 = vmatprep.subr.mxu0 %v703
    %753 = vmatpush1.msra.mxu0 %v702
    %754 = vmatprep.subr.mxu0 %v699
    %755 = vmatpush1.msra.mxu0 %v698
    %756 = vmatprep.subr.mxu0 %v695
    %757 = vmatpush1.msra.mxu0 %v694
    %758 = vmatprep.subr.mxu0 %v691
    %759 = vmatpush1.msra.mxu0 %v690
    %760 = vmatprep.subr.mxu0 %v687
    %761 = vmatpush1.msra.mxu0 %v686
    %762 = vmatprep.subr.mxu0 0.0
    %763 = vmatpush2.msra.mxu0 0.0
    %764 = vmatprep.subr.mxu0 0.0
    %765 = vmatpush2.msra.mxu0 0.0
    %766 = vmatprep.subr.mxu0 0.0
    %767 = vmatpush2.msra.mxu0 0.0
    %768 = vmatprep.subr.mxu0 0.0
    %769 = vmatpush2.msra.mxu0 0.0
    %770 = vmatprep.subr.mxu0 0.0
    %771 = vmatpush2.msra.mxu0 0.0
    %772 = vmatprep.subr.mxu0 0.0
    %773 = vmatpush2.msra.mxu0 0.0
    %774 = vmatprep.subr.mxu0 0.0
    %775 = vmatpush2.msra.mxu0 0.0
    %776 = vmatprep.subr.mxu0 0.0
    %777 = vmatpush2.msra.mxu0 0.0
    %778 = vmatprep.subr.mxu0 0.0
    %779 = vmatpush2.msra.mxu0 0.0
    %780 = vmatprep.subr.mxu0 0.0
    %781 = vmatpush2.msra.mxu0 0.0
    %782 = vmatprep.subr.mxu0 0.0
    %783 = vmatpush2.msra.mxu0 0.0
    %784 = vmatprep.subr.mxu0 0.0
    %785 = vmatpush2.msra.mxu0 0.0
    %786 = vmatprep.subr.mxu0 0.0
    %787 = vmatpush2.msra.mxu0 0.0
    %788 = vmatprep.subr.mxu0 0.0
    %789 = vmatpush2.msra.mxu0 0.0
    %790 = vmatprep.subr.mxu0 0.0
    %791 = vmatpush2.msra.mxu0 0.0
    %792 = vmatprep.subr.mxu0 0.0
    %793 = vmatpush2.msra.mxu0 0.0
    %794 = vmatprep.mubr.f32.mxu0 0.0
    %795 = vmatmul.mubr.f32.gmra.mxu0 %v728
    %v796 = vpop.f32.mrf.mxu0
    %v797 = vadd.f32 %v725, %v796
    %v798 = vpop.f32.mrf.mxu0
    %v799 = vadd.f32 %v725, %v798
    %800 = vdwg.mxu0
    %801 = vmatprep.subr.mxu0 0.0
    %802 = vmatpush1.msra.mxu0 0.0
    %803 = vmatprep.subr.mxu0 0.0
    %804 = vmatpush1.msra.mxu0 0.0
    %805 = vmatprep.subr.mxu0 0.0
    %806 = vmatpush1.msra.mxu0 0.0
    %807 = vmatprep.subr.mxu0 0.0
    %808 = vmatpush1.msra.mxu0 0.0
    %809 = vmatprep.subr.mxu0 0.0
    %810 = vmatpush1.msra.mxu0 0.0
    %811 = vmatprep.subr.mxu0 0.0
    %812 = vmatpush1.msra.mxu0 0.0
    %813 = vmatprep.subr.mxu0 0.0
    %814 = vmatpush1.msra.mxu0 0.0
    %815 = vmatprep.subr.mxu0 %v721
    %816 = vmatpush1.msra.mxu0 %v720
    %817 = vmatprep.subr.mxu0 %v717
    %818 = vmatpush1.msra.mxu0 %v716
    %819 = vmatprep.subr.mxu0 %v713
    %820 = vmatpush1.msra.mxu0 %v712
    %821 = vmatprep.subr.mxu0 %v709
    %822 = vmatpush1.msra.mxu0 %v708
    %823 = vmatprep.subr.mxu0 %v705
    %824 = vmatpush1.msra.mxu0 %v704
    %825 = vmatprep.subr.mxu0 %v701
    %826 = vmatpush1.msra.mxu0 %v700
    %827 = vmatprep.subr.mxu0 %v697
    %828 = vmatpush1.msra.mxu0 %v696
    %829 = vmatprep.subr.mxu0 %v693
    %830 = vmatpush1.msra.mxu0 %v692
    %831 = vmatprep.subr.mxu0 %v689
    %832 = vmatpush1.msra.mxu0 %v688
    %833 = vmatprep.subr.mxu0 0.0
    %834 = vmatpush2.msra.mxu0 0.0
    %835 = vmatprep.subr.mxu0 0.0
    %836 = vmatpush2.msra.mxu0 0.0
    %837 = vmatprep.subr.mxu0 0.0
    %838 = vmatpush2.msra.mxu0 0.0
    %839 = vmatprep.subr.mxu0 0.0
    %840 = vmatpush2.msra.mxu0 0.0
    %841 = vmatprep.subr.mxu0 0.0
    %842 = vmatpush2.msra.mxu0 0.0
    %843 = vmatprep.subr.mxu0 0.0
    %844 = vmatpush2.msra.mxu0 0.0
    %845 = vmatprep.subr.mxu0 0.0
    %846 = vmatpush2.msra.mxu0 0.0
    %847 = vmatprep.subr.mxu0 0.0
    %848 = vmatpush2.msra.mxu0 0.0
    %849 = vmatprep.subr.mxu0 0.0
    %850 = vmatpush2.msra.mxu0 0.0
    %851 = vmatprep.subr.mxu0 0.0
    %852 = vmatpush2.msra.mxu0 0.0
    %853 = vmatprep.subr.mxu0 0.0
    %854 = vmatpush2.msra.mxu0 0.0
    %855 = vmatprep.subr.mxu0 0.0
    %856 = vmatpush2.msra.mxu0 0.0
    %857 = vmatprep.subr.mxu0 0.0
    %858 = vmatpush2.msra.mxu0 0.0
    %859 = vmatprep.subr.mxu0 0.0
    %860 = vmatpush2.msra.mxu0 0.0
    %861 = vmatprep.subr.mxu0 0.0
    %862 = vmatpush2.msra.mxu0 0.0
    %863 = vmatprep.subr.mxu0 0.0
    %864 = vmatpush2.msra.mxu0 0.0
    %865 = vmatprep.mubr.f32.mxu0 0.0
    %866 = vmatmul.mubr.f32.gmra.mxu0 %v728
    %v867 = vpop.f32.mrf.mxu0
    %v868 = vadd.f32 %v725, %v867
    %v869 = vpop.f32.mrf.mxu0
    %v870 = vadd.f32 %v725, %v869
    %871 = vdwg.mxu0
    %v872 = vmax.f32 %v797, 0.0
    %v873 = vmax.f32 %v799, 0.0
    %v874 = vmax.f32 %v868, 0.0
    %v875 = vmax.f32 %v870, 0.0
    %v880 = vrot.slane %v476, 2
    %v881 = vrot.slane %v477, 2
    %v882 = vrot.slane %v478, 2
    %v883 = vrot.slane %v479, 2
    %v892 = vrot.slane %v872, 7
    %v893 = vrot.slane %v873, 7
    %v894 = vrot.slane %v874, 7
    %v895 = vrot.slane %v875, 7
    %v900 = vrot.slane %v872, 1
    %v901 = vrot.slane %v873, 1
    %v902 = vrot.slane %v874, 1
    %v903 = vrot.slane %v875, 1
    %v908 = vrot.slane %v872, 3
    %v909 = vrot.slane %v873, 3
    %v910 = vrot.slane %v874, 3
    %v911 = vrot.slane %v875, 3
    %vm916 = vcmask 1040384
    %v917 = vsel %vm916, %v476, %v880
    %v918 = vsel %vm916, %v477, %v881
    %v919 = vsel %vm916, %v478, %v882
    %v920 = vsel %vm916, %v479, %v883
    %vm921 = vcmask 1041408
    %v922 = vsel %vm921, %v917, %v892
    %v923 = vsel %vm921, %v918, %v893
    %v924 = vsel %vm921, %v919, %v894
    %v925 = vsel %vm921, %v920, %v895
    %vm926 = vcmask 1042432
    %v927 = vsel %vm926, %v922, %v900
    %v928 = vsel %vm926, %v923, %v901
    %v929 = vsel %vm926, %v924, %v902
    %v930 = vsel %vm926, %v925, %v903
    %vm931 = vcmask 1043456
    %v932 = vsel %vm931, %v927, %v908
    %v933 = vsel %vm931, %v928, %v909
    %v934 = vsel %vm931, %v929, %v910
    %v935 = vsel %vm931, %v930, %v911
    %936 = vst [vmem:[#allocation9] sm:$0x1f] %v932
    %937 = vst [vmem:[#allocation9 + $0x8] sm:$0x1f] %v933
    %938 = vst [vmem:[#allocation9 + $0x10] sm:$0x1f] %v934
    %939 = vst [vmem:[#allocation9 + $0x18] sm:$0x1f] %v935
    %v940 = vrot.slane %v872, 5
    %v941 = vrot.slane %v873, 5
    %v942 = vrot.slane %v874, 5
    %v943 = vrot.slane %v875, 5
    %v948 = vsel %vm921, %v900, %v940
    %v949 = vsel %vm921, %v901, %v941
    %v950 = vsel %vm921, %v902, %v942
    %v951 = vsel %vm921, %v903, %v943
    %v956 = vcombine.low %v948, %v949
    %v957 = vcombine.low %v950, %v951
    %960 = vst [vmem:[#allocation10] sm:$0x77] %v956
    %961 = vst [vmem:[#allocation10 + $0x8] sm:$0x77] %v957
    // Predicated region
    $region42: #{tpu_custom_call.1} parent=1 // pred_check
      _
    $region43: #{tpu_custom_call.1} parent=1 // pred_check_branch
      %963 = sbr.rel (0) target = $region45
    $region44: #{tpu_custom_call.1} parent=1 // pred_region
      %s965 = ssub.s32 512, 512
      %966 = vsyncadd [#allocation5], %s965
      %s968 = sshll.u32 [#allocation9], 4
      %s969 = int_to_ptr.vmem [resolvable:$true] %s968
      %971 = dma.vmem_to_hbm [thread:$0]  %s969, 512, %s7, [#allocation5]
    $region45: #{tpu_custom_call.1} parent=1 // pred_fallthru
      _
    // Predicated region
    $region46: #{tpu_custom_call.1} parent=1 // pred_check
      _
    $region47: #{tpu_custom_call.1} parent=1 // pred_check_branch
      %973 = sbr.rel (0) target = $region49
    $region48: #{tpu_custom_call.1} parent=1 // pred_region
      %s975 = ssub.s32 256, 256
      %976 = vsyncadd [#allocation11], %s975
      %s978 = sshll.u32 [#allocation10], 4
      %s979 = int_to_ptr.vmem [resolvable:$true] %s978
      %981 = dma.vmem_to_hbm [thread:$0]  %s979, 256, %s8, [#allocation11]
    $region49: #{tpu_custom_call.1} parent=1 // pred_fallthru
      _
    // Predicated region
    $region50: #{tpu_custom_call.1} parent=1 // pred_check
      _
    $region51: #{tpu_custom_call.1} parent=1 // pred_check_branch
      %983 = sbr.rel (0) target = $region53
    $region52: #{tpu_custom_call.1} parent=1 // pred_region
      %984 = dma.done [#allocation5], 512
    $region53: #{tpu_custom_call.1} parent=1 // pred_fallthru
      _
    // Predicated region
    $region54: #{tpu_custom_call.1} parent=1 // pred_check
      _
    $region55: #{tpu_custom_call.1} parent=1 // pred_check_branch
      %986 = sbr.rel (0) target = $region57
    $region56: #{tpu_custom_call.1} parent=1 // pred_region
      %987 = dma.done [#allocation11], 256
    $region57: #{tpu_custom_call.1} parent=1 // pred_fallthru
      _
    %988 = vsyncpa [#allocation4], 1
    %989 = vsyncpa [#allocation7], 1
    %990 = vsyncpa [#allocation5], 1
    %991 = vsyncpa [#allocation11], 1

</llo_original>
